<compile_context>
chip_gen: v7x
topology: tpu7x:2x2x1
jax: 0.10.0
libtpu: 0.0.40
codegen_flags: <defaults>
</compile_context>

<pallas_src>
import functools

import jax
import jax.numpy as jnp
from jax.experimental import pallas as pl
from jax.experimental.pallas import tpu as pltpu


def _proj_relu_kernel(x_ref, w_ref, b_ref, o_ref):
    """One (batch, pixel-tile) block: out = relu(W @ X + b).

    x_ref: (C, TP)  input pixels, pixel dim in lanes
    w_ref: (F, C)   resident projection weights
    b_ref: (F, 1)   resident bias
    o_ref: (F, TP)  output, pixel dim in lanes (unmasked lane-dense stores)
    """
    x = x_ref[...]
    w = w_ref[...]
    b = b_ref[...]
    C = x.shape[0]
    F = w.shape[0]

    if C <= 8:
        # Tiny contraction known at trace time: unrolled VPU broadcast-FMA
        # (avoids near-empty systolic passes with K padded to 128).
        acc = jnp.zeros((F, x.shape[1]), jnp.float32)
        for c in range(C):
            acc = acc + (w[:, c:c + 1].astype(jnp.float32)
                         * x[c:c + 1, :].astype(jnp.float32))
    else:
        # Realistic channel counts: MXU matmul with f32 accumulation.
        acc = jnp.dot(w, x.astype(w.dtype),
                      preferred_element_type=jnp.float32)

    acc = acc + b.astype(jnp.float32)            # (F, TP) + (F, 1) broadcast
    o_ref[...] = jnp.maximum(acc, 0.0).astype(o_ref.dtype)


def _choose_pixel_tile(P, max_tile=2048):
    """Pick a lane-dense pixel tile: full row if it fits, else a 128-multiple."""
    if P <= max_tile:
        return P                      # block == full array dim -> always legal
    return max((max_tile // 128) * 128, 128)   # Pallas masks the tail block


@functools.partial(jax.jit, static_argnames=("max_tile",))
def _channel_projection(x3d, w, b, *, max_tile=2048):
    """x3d: (B, C, P), w: (F, C), b: (F, 1) -> (B, F, P) = relu(w @ x + b)."""
    B, C, P = x3d.shape
    F = w.shape[0]
    TP = _choose_pixel_tile(P, max_tile)

    return pl.pallas_call(
        _proj_relu_kernel,
        out_shape=jax.ShapeDtypeStruct((B, F, P), x3d.dtype),
        grid_spec=pltpu.PrefetchScalarGridSpec(
            num_scalar_prefetch=0,
            grid=(B, pl.cdiv(P, TP)),
            in_specs=[
                # pixel tile: batch squeezed, channels in sublanes, pixels in lanes
                pl.BlockSpec((None, C, TP), lambda bi, j: (bi, 0, j)),
                # weights / bias: grid-invariant residents
                pl.BlockSpec((F, C), lambda bi, j: (0, 0)),
                pl.BlockSpec((F, 1), lambda bi, j: (0, 0)),
            ],
            out_specs=pl.BlockSpec((None, F, TP), lambda bi, j: (bi, 0, j)),
        ),
        compiler_params=pltpu.CompilerParams(
            # Fully independent blocks -> shard across v7x's 2 TensorCores.
            dimension_semantics=("parallel", "parallel")),
    )(x3d, w, b)


class ProtoModelPallas:
    """JAX/Pallas equivalent of _ProtoModel with a synthetic 1x1-conv model."""

    def __init__(self, in_channels, out_features, target="totally_padded_image",
                 key=None):
        self.target = target
        key = jax.random.PRNGKey(0) if key is None else key
        kw, kb = jax.random.split(key)
        # Deterministic synthetic parameters, stored in (F, C) orientation so
        # the kernel consumes them directly (no transpose).
        self.weight = (jax.random.normal(kw, (out_features, in_channels),
                                         jnp.float32) * 0.1)
        self.bias = (jax.random.normal(kb, (out_features, 1),
                                       jnp.float32) * 0.1)

    def __call__(self, x):
        img = x[self.target]                       # NCHW (B, C, H, W)
        # .to(device) analogue: keep the incoming dtype (no forced f32 upcast;
        # bf16/f32 both supported, accumulation is f32 inside the kernel).
        B, C, H, W = img.shape
        x3d = img.reshape(B, C, H * W)             # free reshape (NCHW contiguous)
        y3d = _channel_projection(x3d, self.weight, self.bias)
        out = y3d.reshape(B, self.weight.shape[0], H, W)   # free reshape -> NCHW
        # Same tensor under both keys, matching the PyTorch wrapper.
        return {"features": out, "language_head_output": out}


if __name__ == "__main__":
    key = jax.random.PRNGKey(0)
    k_img, k_params = jax.random.split(key)

    B, C, H, W = 2, 4, 16, 16          # small NCHW image
    F = 8                              # synthetic backbone output channels

    img = jax.random.normal(k_img, (B, C, H, W), jnp.float32)
    batch = {"totally_padded_image": img}

    model = ProtoModelPallas(in_channels=C, out_features=F, key=k_params)
    out = model(batch)

    jax.block_until_ready(out["features"])
    jax.block_until_ready(out["language_head_output"])

    assert out["features"].shape == (B, F, H, W)
    assert out["language_head_output"].shape == (B, F, H, W)

    # Reference check against plain JAX (same orientation, no transposes).
    ref = jnp.maximum(
        jnp.einsum("fc,bcp->bfp", model.weight, img.reshape(B, C, H * W))
        + model.bias[None, :, :], 0.0).reshape(B, F, H, W)
    assert jnp.allclose(out["features"], ref, atol=1e-5, rtol=1e-5)

    # TODO(synk): the injected `self.model` backbone is unspecified in the
    # PyTorch source; the 1x1-conv+ReLU here is a deterministic stand-in.
    print("KERNEL_OK")
</pallas_src>

<mosaic_0001>
module attributes {stable_mosaic.version = 11 : i64} {
  func.func @_proj_relu_kernel(%arg0: i32, %arg1: i32, %arg2: memref<1x4x256xf32, #tpu.memory_space<vmem>>, %arg3: memref<8x4xf32, #tpu.memory_space<vmem>>, %arg4: memref<8x1xf32, #tpu.memory_space<vmem>>, %arg5: memref<1x8x256xf32, #tpu.memory_space<vmem>>) attributes {dimension_semantics = [#tpu.dimension_semantics<parallel>, #tpu.dimension_semantics<parallel>], iteration_bounds = array<i64: 2, 1>, scalar_prefetch = 0 : i64, scratch_operands = 0 : i64, tpu.core_type = #tpu.core_type<tc>, window_params = [{transform_indices = @transform_0, window_bounds = array<i64: 1, 4, 256>}, {pipeline_mode = #tpu.pipeline_mode<synchronous>, transform_indices = @transform_1, window_bounds = array<i64: 8, 4>}, {pipeline_mode = #tpu.pipeline_mode<synchronous>, transform_indices = @transform_2, window_bounds = array<i64: 8, 1>}, {transform_indices = @transform_3, window_bounds = array<i64: 1, 8, 256>}]} {
    %c0 = arith.constant 0 : index
    %c0_0 = arith.constant 0 : index
    %c0_1 = arith.constant 0 : index
    %0 = vector.load %arg2[%c0, %c0_0, %c0_1] : memref<1x4x256xf32, #tpu.memory_space<vmem>>, vector<1x4x256xf32>
    %1 = vector.shape_cast %0 : vector<1x4x256xf32> to vector<4x256xf32>
    %c0_2 = arith.constant 0 : index
    %c0_3 = arith.constant 0 : index
    %2 = vector.load %arg3[%c0_2, %c0_3] : memref<8x4xf32, #tpu.memory_space<vmem>>, vector<8x4xf32>
    %c0_4 = arith.constant 0 : index
    %c0_5 = arith.constant 0 : index
    %3 = vector.load %arg4[%c0_4, %c0_5] : memref<8x1xf32, #tpu.memory_space<vmem>>, vector<8x1xf32>
    %cst = arith.constant 0.000000e+00 : f32
    %4 = vector.broadcast %cst : f32 to vector<8x256xf32>
    %5 = vector.extract_strided_slice %2 {offsets = [0, 0], sizes = [8, 1], strides = [1, 1]} : vector<8x4xf32> to vector<8x1xf32>
    %6 = vector.extract_strided_slice %1 {offsets = [0, 0], sizes = [1, 256], strides = [1, 1]} : vector<4x256xf32> to vector<1x256xf32>
    %7 = vector.broadcast %5 : vector<8x1xf32> to vector<8x256xf32>
    %8 = vector.broadcast %6 : vector<1x256xf32> to vector<8x256xf32>
    %9 = arith.mulf %7, %8 : vector<8x256xf32>
    %10 = arith.addf %4, %9 : vector<8x256xf32>
    %11 = vector.extract_strided_slice %2 {offsets = [0, 1], sizes = [8, 1], strides = [1, 1]} : vector<8x4xf32> to vector<8x1xf32>
    %12 = vector.extract_strided_slice %1 {offsets = [1, 0], sizes = [1, 256], strides = [1, 1]} : vector<4x256xf32> to vector<1x256xf32>
    %13 = vector.broadcast %11 : vector<8x1xf32> to vector<8x256xf32>
    %14 = vector.broadcast %12 : vector<1x256xf32> to vector<8x256xf32>
    %15 = arith.mulf %13, %14 : vector<8x256xf32>
    %16 = arith.addf %10, %15 : vector<8x256xf32>
    %17 = vector.extract_strided_slice %2 {offsets = [0, 2], sizes = [8, 1], strides = [1, 1]} : vector<8x4xf32> to vector<8x1xf32>
    %18 = vector.extract_strided_slice %1 {offsets = [2, 0], sizes = [1, 256], strides = [1, 1]} : vector<4x256xf32> to vector<1x256xf32>
    %19 = vector.broadcast %17 : vector<8x1xf32> to vector<8x256xf32>
    %20 = vector.broadcast %18 : vector<1x256xf32> to vector<8x256xf32>
    %21 = arith.mulf %19, %20 : vector<8x256xf32>
    %22 = arith.addf %16, %21 : vector<8x256xf32>
    %23 = vector.extract_strided_slice %2 {offsets = [0, 3], sizes = [8, 1], strides = [1, 1]} : vector<8x4xf32> to vector<8x1xf32>
    %24 = vector.extract_strided_slice %1 {offsets = [3, 0], sizes = [1, 256], strides = [1, 1]} : vector<4x256xf32> to vector<1x256xf32>
    %25 = vector.broadcast %23 : vector<8x1xf32> to vector<8x256xf32>
    %26 = vector.broadcast %24 : vector<1x256xf32> to vector<8x256xf32>
    %27 = arith.mulf %25, %26 : vector<8x256xf32>
    %28 = arith.addf %22, %27 : vector<8x256xf32>
    %29 = vector.broadcast %3 : vector<8x1xf32> to vector<8x256xf32>
    %30 = arith.addf %28, %29 : vector<8x256xf32>
    %cst_6 = arith.constant 0.000000e+00 : f32
    %31 = vector.broadcast %cst_6 : f32 to vector<8x256xf32>
    %32 = arith.maximumf %30, %31 : vector<8x256xf32>
    %c0_7 = arith.constant 0 : index
    %c0_8 = arith.constant 0 : index
    %c0_9 = arith.constant 0 : index
    %33 = vector.load %arg5[%c0_7, %c0_8, %c0_9] : memref<1x8x256xf32, #tpu.memory_space<vmem>>, vector<1x8x256xf32>
    %34 = vector.shape_cast %33 : vector<1x8x256xf32> to vector<8x256xf32>
    %35 = vector.shape_cast %32 : vector<8x256xf32> to vector<1x8x256xf32>
    tpu.vector_store %arg5[%c0_7, %c0_8, %c0_9], %35 {strides = array<i32>} : memref<1x8x256xf32, #tpu.memory_space<vmem>>, vector<1x8x256xf32>,
    return
  }
  func.func @transform_0(%arg0: i32, %arg1: i32) -> (i32, i32, i32) {
    %c0_i32 = arith.constant 0 : i32
    %c0_i32_0 = arith.constant 0 : i32
    return %arg0, %c0_i32, %arg1 : i32, i32, i32
  }
  func.func @transform_1(%arg0: i32, %arg1: i32) -> (i32, i32) {
    %c0_i32 = arith.constant 0 : i32
    %c0_i32_0 = arith.constant 0 : i32
    %c0_i32_1 = arith.constant 0 : i32
    return %c0_i32, %c0_i32_0 : i32, i32
  }
  func.func @transform_2(%arg0: i32, %arg1: i32) -> (i32, i32) {
    %c0_i32 = arith.constant 0 : i32
    %c0_i32_0 = arith.constant 0 : i32
    %c0_i32_1 = arith.constant 0 : i32
    return %c0_i32, %c0_i32_0 : i32, i32
  }
  func.func @transform_3(%arg0: i32, %arg1: i32) -> (i32, i32, i32) {
    %c0_i32 = arith.constant 0 : i32
    %c0_i32_0 = arith.constant 0 : i32
    return %arg0, %c0_i32, %arg1 : i32, i32, i32
  }
}

</mosaic_0001>

<llo_original>
// kernel: _channel_projection.1
$region0: #{_channel_projection.1}
  #allocation0 [shape = 'u32[]', space=smem, size = 0x4, offset = 0x4, fixed_abs, tag = 'smem constant byte address 0x4 - core index']
  #allocation1 [shape = 'u32[144,128]{1,0:T(1,128)}', space=vmem, size = 0x12000, scoped, tag = 'internal scratch']
  %s0 = inlined_call_operand.vmem [shape: f32[2,4,256], index: 0, kind: input, shape index: {}]
  %s1 = inlined_call_operand.vmem [shape: f32[8,4], index: 1, kind: input, shape index: {}]
  %s2 = inlined_call_operand.vmem [shape: f32[8,1], index: 2, kind: input, shape index: {}]
  %s3 = inlined_call_operand.hbm [shape: f32[2,8,256], index: 3, kind: output, shape index: {}]
  %s4 = sld [smem:[#allocation0]]
  $region45: #{_channel_projection.1} parent=0
    _
  %s6 = ssub.s32 1, %s4
  %s7 = scalar_select 0, %s6, %s4
  $region1: #{_channel_projection.1} parent=0
    #allocation2 [shape = 'u8[16384]{0}', space=vmem, size = 0x4000, scoped, tag = 'output window, operand 0']
    #allocation3 [shape = 's32[2]{0}', space=sflag, size = 0x8, scoped, tag = 'scoped memory for _channel_projection.1']
    %8 = vsyncpa [#allocation3], 0
    %s9 = scalar_lea.sflag [#allocation3], 1
    %10 = vsyncpa %s9, 0
    loop: start=0, step=1, limit=4
    $region2: #{_channel_projection.1} parent=1 // loop_pre_header
      _
    $region3: #{_channel_projection.1} parent=1 // loop_header
      %s12 = sphi 0, %s16
      %p13 = scmp.ge.s32.totalorder %s12, 4
      %s19 = sphi 0, %s31
      %s20 = sphi 0, %s27
      %s21 = sphi 0, %s19
      %s22 = sphi 0, %s20
      %s23 = sphi 0, %s21
      %s24 = sphi 0, %s22
      %s36 = sphi 0, %s38
      %s39 = sphi 0, %s36
      %s40 = sphi 0, %s39
      %s56 = sphi 0, %s40
      %s60 = sphi 0, %s60
      %s62 = sphi 0, %s60
      %s63 = sphi 0, %s62
      %s77 = sphi 0, %s63
      %s81 = sphi 0, %s81
      %s83 = sphi 0, %s81
      %s84 = sphi 0, %s83
      %s98 = sphi 0, %s84
      %s106 = sphi 0, %s108
      %s109 = sphi 0, %s106
      %s110 = sphi 0, %s109
      %s126 = sphi 0, %s110
    $region4: #{_channel_projection.1} parent=1 // loop_header_branch
      %15 = sbr.rel (%p13) target = $region8
    $region5: #{_channel_projection.1} parent=1 // loop_body
      %s17 = ssub.s32 %s12, 1
      %s18 = ssub.s32 %s12, 2
      %s25 = sadd.s32 1, %s20
      %p26 = scmp.ge.s32.totalorder %s25, 1
      %s27 = scalar_select %p26, 0, %s25
      %s28 = sadd.s32 1, %s19
      %s29 = scalar_select %p26, %s28, %s19
      %p30 = scmp.ge.s32.totalorder %s29, 2
      %s31 = scalar_select %p30, 0, %s29
      %s32 = ssub.s32 %s19, %s31
      %s33 = ssub.s32 %s20, %s27
      %s34 = sor.u32 %s32, %s33
      %p35 = scmp.eq.s32.totalorder %s34, 0
      %s37 = sadd.s32 %s36, 1
      %s38 = scalar_select %p35, %s36, %s37
      %p41 = pneg %p35
      %p42 = scmp.eq.s32.totalorder %s12, 1
      %p43 = por %p41, %p42
      %p44 = scmp.ne.s32.totalorder %s36, %s39
      %p45 = scmp.eq.s32.totalorder %s12, 0
      %p46 = por %p44, %p45
      %p47 = scmp.ne.s32.totalorder %s36, %s39
      %p48 = scmp.eq.s32.totalorder %s17, 1
      %p49 = por %p47, %p48
      %p50 = scmp.ne.s32.totalorder %s39, %s40
      %p51 = scmp.eq.s32.totalorder %s17, 0
      %p52 = por %p50, %p51
      %p53 = scmp.ne.s32.totalorder %s39, %s40
      %p54 = scmp.eq.s32.totalorder %s18, 1
      %p55 = por %p53, %p54
      %p57 = scmp.ne.s32.totalorder %s40, %s56
      %p58 = scmp.eq.s32.totalorder %s18, 0
      %p59 = por %p57, %p58
      %s61 = sadd.s32 %s60, 1
      %p64 = scmp.eq.s32.totalorder %s12, 1
      %p65 = scmp.ne.s32.totalorder %s60, %s62
      %p66 = scmp.eq.s32.totalorder %s12, 0
      %p67 = por %p65, %p66
      %p68 = scmp.ne.s32.totalorder %s60, %s62
      %p69 = scmp.eq.s32.totalorder %s17, 1
      %p70 = por %p68, %p69
      %p71 = scmp.ne.s32.totalorder %s62, %s63
      %p72 = scmp.eq.s32.totalorder %s17, 0
      %p73 = por %p71, %p72
      %p74 = scmp.ne.s32.totalorder %s62, %s63
      %p75 = scmp.eq.s32.totalorder %s18, 1
      %p76 = por %p74, %p75
      %p78 = scmp.ne.s32.totalorder %s63, %s77
      %p79 = scmp.eq.s32.totalorder %s18, 0
      %p80 = por %p78, %p79
      %s82 = sadd.s32 %s81, 1
      %p85 = scmp.eq.s32.totalorder %s12, 1
      %p86 = scmp.ne.s32.totalorder %s81, %s83
      %p87 = scmp.eq.s32.totalorder %s12, 0
      %p88 = por %p86, %p87
      %p89 = scmp.ne.s32.totalorder %s81, %s83
      %p90 = scmp.eq.s32.totalorder %s17, 1
      %p91 = por %p89, %p90
      %p92 = scmp.ne.s32.totalorder %s83, %s84
      %p93 = scmp.eq.s32.totalorder %s17, 0
      %p94 = por %p92, %p93
      %p95 = scmp.ne.s32.totalorder %s83, %s84
      %p96 = scmp.eq.s32.totalorder %s18, 1
      %p97 = por %p95, %p96
      %p99 = scmp.ne.s32.totalorder %s84, %s98
      %p100 = scmp.eq.s32.totalorder %s18, 0
      %p101 = por %p99, %p100
      %s102 = ssub.s32 %s19, %s31
      %s103 = ssub.s32 %s20, %s27
      %s104 = sor.u32 %s102, %s103
      %p105 = scmp.eq.s32.totalorder %s104, 0
      %s107 = sadd.s32 %s106, 1
      %s108 = scalar_select %p105, %s106, %s107
      %p111 = pneg %p105
      %p112 = scmp.eq.s32.totalorder %s12, 1
      %p113 = por %p111, %p112
      %p114 = scmp.ne.s32.totalorder %s106, %s109
      %p115 = scmp.eq.s32.totalorder %s12, 0
      %p116 = por %p114, %p115
      %p117 = scmp.ne.s32.totalorder %s106, %s109
      %p118 = scmp.eq.s32.totalorder %s17, 1
      %p119 = por %p117, %p118
      %p120 = scmp.ne.s32.totalorder %s109, %s110
      %p121 = scmp.eq.s32.totalorder %s17, 0
      %p122 = por %p120, %p121
      %p123 = scmp.ne.s32.totalorder %s109, %s110
      %p124 = scmp.eq.s32.totalorder %s18, 1
      %p125 = por %p123, %p124
      %p127 = scmp.ne.s32.totalorder %s110, %s126
      %p128 = scmp.eq.s32.totalorder %s18, 0
      %p129 = por %p127, %p128
      %p130 = scmp.le.s32.totalorder 1, %s12
      %p131 = scmp.lt.s32.totalorder %s12, 3
      %p132 = pnand %p130, %p131
      %p133 = pneg %p132
      // Predicated region
      $region9: #{_channel_projection.1} parent=5 // pred_check
        _
      $region10: #{_channel_projection.1} parent=5 // pred_check_branch
        %135 = sbr.rel (%p132) target = $region12
      $region11: #{_channel_projection.1} parent=5 // pred_region
        %s136 = ssub.s32 %s12, 1
        // Predicated region
        $region13: #{_channel_projection.1} parent=11 // pred_check
          %p137 = pneg %p73
        $region14: #{_channel_projection.1} parent=11 // pred_check_branch
          %139 = sbr.rel (%p137) target = $region16
        $region15: #{_channel_projection.1} parent=11 // pred_region
          _
        $region16: #{_channel_projection.1} parent=11 // pred_fallthru
          _
        // Predicated region
        $region17: #{_channel_projection.1} parent=11 // pred_check
          %p140 = pneg %p94
        $region18: #{_channel_projection.1} parent=11 // pred_check_branch
          %142 = sbr.rel (%p140) target = $region20
        $region19: #{_channel_projection.1} parent=11 // pred_region
          _
        $region20: #{_channel_projection.1} parent=11 // pred_fallthru
          _
      $region12: #{_channel_projection.1} parent=5 // pred_fallthru
        _
      %p143 = scmp.lt.s32.totalorder %s12, 2
      // Predicated region
      $region21: #{_channel_projection.1} parent=5 // pred_check
        %p144 = pneg %p143
      $region22: #{_channel_projection.1} parent=5 // pred_check_branch
        %146 = sbr.rel (%p144) target = $region24
      $region23: #{_channel_projection.1} parent=5 // pred_region
        // Predicated region
        $region25: #{_channel_projection.1} parent=23 // pred_check
          %p147 = pneg %p46
        $region26: #{_channel_projection.1} parent=23 // pred_check_branch
          %149 = sbr.rel (%p147) target = $region28
        $region27: #{_channel_projection.1} parent=23 // pred_region
          %s150 = smul.u32 2, %s20
          %p151 = scmp.lt.s32.totalorder %s19, 1
          %s152 = scalar_select %p151, %s19, 1
          %p153 = scmp.lt.s32.totalorder %s150, 1
          %s154 = scalar_select %p153, %s150, 1
          %s155 = smul.addr %s152, 2
          %s156 = sadd.s32 %s154, %s155
          %s157 = smul.addr %s156, 4
          %s158 = scalar_lea.vmem %s0, %s157
          %s159 = smul.u32 2, %s20
        $region28: #{_channel_projection.1} parent=23 // pred_fallthru
          _
      $region24: #{_channel_projection.1} parent=5 // pred_fallthru
        _
      %p160 = scmp.le.s32.totalorder 1, %s12
      %p161 = scmp.lt.s32.totalorder %s12, 3
      %p162 = pnand %p160, %p161
      %p163 = pneg %p162
      // Predicated region
      $region29: #{_channel_projection.1} parent=5 // pred_check
        _
      $region30: #{_channel_projection.1} parent=5 // pred_check_branch
        %165 = sbr.rel (%p162) target = $region32
      $region31: #{_channel_projection.1} parent=5 // pred_region
        %s166 = ssub.s32 %s12, 1
        %s167 = smul.u32 2, %s22
        %p168 = scmp.lt.s32.totalorder %s21, 1
        %s169 = scalar_select %p168, %s21, 1
        %p170 = scmp.lt.s32.totalorder %s167, 1
        %s171 = scalar_select %p170, %s167, 1
        %s172 = smul.addr %s169, 2
        %s173 = sadd.s32 %s171, %s172
        %s174 = smul.addr %s173, 4
        %s175 = scalar_lea.vmem %s0, %s174
        %p176 = pneg %p52
        %p177 = pneg %p49
        %p178 = pneg %p73
        %p179 = pneg %p70
        %p180 = pneg %p94
        %p181 = pneg %p91
        %p182 = pneg %p122
        %p183 = pneg %p119
        %s184 = sand.u32 %s109, 1
        %s185 = scalar_lea.sflag [#allocation3], %s184
        %s186 = sand.u32 %s109, 1
        %s187 = smul.addr %s186, 16
        %s188 = scalar_lea.vmem [#allocation2], %s187
        %s189 = smul.u32 2, %s22
        %p190 = scmp.lt.s32.totalorder %s21, 1
        %s191 = scalar_select %p190, %s21, 1
        %p192 = scmp.lt.s32.totalorder %s189, 1
        %s193 = scalar_select %p192, %s189, 1
        %s194 = smul.addr %s191, 2
        %s195 = sadd.s32 %s193, %s194
        %s196 = smul.addr %s195, 4
        %s197 = scalar_lea.vmem %s0, %s196
        %s198 = smul.u32 2, %s22
        %s199 = smul.u32 2, %s22
        %v200 = vld [vmem:[%s197] sm:$0xff]
        %v201 = vld [vmem:[%s1] sm:$0xff]
        %v202 = vld [vmem:[%s2] sm:$0xff]
        %204 = vset.pattern.permute.xlu0 0
        %205 = vperm.xlu0 %204, %v201
        %v206 = vpop.permute.xlu0 %205
        %v209 = vlaneseq
        %v210 = vshrl.u32 %v209, 7
        %v211 = vsub.s32 0, %v210
        %v212 = vrot.slane %v200, %v211
        %v213 = vlaneseq
        %v214 = vshrl.u32 %v213, 7
        %v215 = vsub.s32 4, %v214
        %v216 = vrot.slane %v200, %v215
        %v219 = vlaneseq
        %v220 = vshrl.u32 %v219, 7
        %v221 = vsub.s32 0, %v220
        %v222 = vrot.slane %v212, %v221
        %v223 = vlaneseq
        %v224 = vshrl.u32 %v223, 7
        %v225 = vsub.s32 0, %v224
        %v226 = vrot.slane %v216, %v225
        %v227 = vmul.f32 %v206, %v222
        %v228 = vmul.f32 %v206, %v226
        %v229 = vadd.f32 %v227, 0.0
        %v230 = vadd.f32 %v228, 0.0
        %231 = vset.pattern.permute.xlu0 1
        %232 = vperm.xlu0 %231, %v201
        %v233 = vpop.permute.xlu0 %232
        %v235 = vlaneseq
        %v236 = vshrl.u32 %v235, 7
        %v237 = vsub.s32 1, %v236
        %v238 = vrot.slane %v200, %v237
        %v239 = vlaneseq
        %v240 = vshrl.u32 %v239, 7
        %v241 = vsub.s32 5, %v240
        %v242 = vrot.slane %v200, %v241
        %v245 = vlaneseq
        %v246 = vshrl.u32 %v245, 7
        %v247 = vsub.s32 1, %v246
        %v248 = vrot.slane %v238, %v247
        %v249 = vlaneseq
        %v250 = vshrl.u32 %v249, 7
        %v251 = vsub.s32 1, %v250
        %v252 = vrot.slane %v242, %v251
        %v253 = vmul.f32 %v233, %v248
        %v254 = vmul.f32 %v233, %v252
        %v255 = vadd.f32 %v229, %v253
        %v256 = vadd.f32 %v230, %v254
        %257 = vset.pattern.permute.xlu0 2
        %258 = vperm.xlu0 %257, %v201
        %v259 = vpop.permute.xlu0 %258
        %v261 = vlaneseq
        %v262 = vshrl.u32 %v261, 7
        %v263 = vsub.s32 2, %v262
        %v264 = vrot.slane %v200, %v263
        %v265 = vlaneseq
        %v266 = vshrl.u32 %v265, 7
        %v267 = vsub.s32 6, %v266
        %v268 = vrot.slane %v200, %v267
        %v271 = vlaneseq
        %v272 = vshrl.u32 %v271, 7
        %v273 = vsub.s32 2, %v272
        %v274 = vrot.slane %v264, %v273
        %v275 = vlaneseq
        %v276 = vshrl.u32 %v275, 7
        %v277 = vsub.s32 2, %v276
        %v278 = vrot.slane %v268, %v277
        %v279 = vmul.f32 %v259, %v274
        %v280 = vmul.f32 %v259, %v278
        %v281 = vadd.f32 %v255, %v279
        %v282 = vadd.f32 %v256, %v280
        %283 = vset.pattern.permute.xlu0 3
        %284 = vperm.xlu0 %283, %v201
        %v285 = vpop.permute.xlu0 %284
        %v287 = vlaneseq
        %v288 = vshrl.u32 %v287, 7
        %v289 = vsub.s32 3, %v288
        %v290 = vrot.slane %v200, %v289
        %v291 = vlaneseq
        %v292 = vshrl.u32 %v291, 7
        %v293 = vsub.s32 7, %v292
        %v294 = vrot.slane %v200, %v293
        %v297 = vlaneseq
        %v298 = vshrl.u32 %v297, 7
        %v299 = vsub.s32 3, %v298
        %v300 = vrot.slane %v290, %v299
        %v301 = vlaneseq
        %v302 = vshrl.u32 %v301, 7
        %v303 = vsub.s32 3, %v302
        %v304 = vrot.slane %v294, %v303
        %v305 = vmul.f32 %v285, %v300
        %v306 = vmul.f32 %v285, %v304
        %v307 = vadd.f32 %v281, %v305
        %v308 = vadd.f32 %v282, %v306
        %310 = vset.pattern.permute.xlu0 0
        %311 = vperm.xlu0 %310, %v202
        %v312 = vpop.permute.xlu0 %311
        %v314 = vadd.f32 %v307, %v312
        %v315 = vadd.f32 %v308, %v312
        %v316 = vmax.f32 %v314, 0.0
        %v317 = vmax.f32 %v315, 0.0
        %318 = vst [vmem:[%s188] sm:$0xff] %v316
        %319 = vst [vmem:[%s188 + $0x8] sm:$0xff] %v317
        %s320 = sand.u32 %s109, 1
        %s321 = scalar_lea.sflag [#allocation3], %s320
        %s322 = sand.u32 %s109, 1
        %s323 = smul.addr %s322, 16
        %s324 = scalar_lea.vmem [#allocation2], %s323
        // Predicated region
        $region33: #{_channel_projection.1} parent=31 // pred_check
          %p325 = pneg %p119
        $region34: #{_channel_projection.1} parent=31 // pred_check_branch
          %327 = sbr.rel (%p325) target = $region36
        $region35: #{_channel_projection.1} parent=31 // pred_region
          %s328 = smul.u32 2, %s22
          %s330 = ssub.s32 256, 256
          %331 = vsyncadd %s321, %s330
          %s332 = smul.addr %s21, 2
          %s333 = sadd.s32 %s328, %s332
          %s334 = smul.addr %s333, 128
          %s335 = scalar_lea.hbm %s3, %s334
          %s337 = sshll.u32 %s324, 4
          %s338 = int_to_ptr.vmem [resolvable:$true] %s337
          %340 = dma.vmem_to_hbm [thread:$0]  %s338, 256, %s335, %s321
        $region36: #{_channel_projection.1} parent=31 // pred_fallthru
          _
      $region32: #{_channel_projection.1} parent=5 // pred_fallthru
        _
      %p341 = scmp.le.s32.totalorder 2, %s12
      // Predicated region
      $region37: #{_channel_projection.1} parent=5 // pred_check
        %p342 = pneg %p341
      $region38: #{_channel_projection.1} parent=5 // pred_check_branch
        %344 = sbr.rel (%p342) target = $region40
      $region39: #{_channel_projection.1} parent=5 // pred_region
        %s345 = ssub.s32 %s12, 2
        // Predicated region
        $region41: #{_channel_projection.1} parent=39 // pred_check
          %p346 = pneg %p125
        $region42: #{_channel_projection.1} parent=39 // pred_check_branch
          %348 = sbr.rel (%p346) target = $region44
        $region43: #{_channel_projection.1} parent=39 // pred_region
          %s349 = sand.u32 %s110, 1
          %s350 = scalar_lea.sflag [#allocation3], %s349
          %s351 = sand.u32 %s110, 1
          %s352 = smul.addr %s351, 16
          %s353 = scalar_lea.vmem [#allocation2], %s352
          %354 = dma.done %s350, 256
        $region44: #{_channel_projection.1} parent=39 // pred_fallthru
          _
      $region40: #{_channel_projection.1} parent=5 // pred_fallthru
        _
    $region6: #{_channel_projection.1} parent=1 // loop_footer
      %s16 = sadd.s32 1, %s12
    $region7: #{_channel_projection.1} parent=1 // loop_footer_branch
      %11 = sbr.rel target = $region3
    $region8: #{_channel_projection.1} parent=1 // loop_exit
      _
    %355 = vsyncpa [#allocation3], 1
    %s356 = scalar_lea.sflag [#allocation3], 1
    %357 = vsyncpa %s356, 1

</llo_original>
